<compile_context>
chip_gen: v6e
topology: v6e:2x2x1
jax: 0.10.0
libtpu: 0.0.40
codegen_flags: <defaults>
</compile_context>

<pallas_src>
import math

import jax
import jax.numpy as jnp
from jax.experimental import pallas as pl
from jax.experimental.pallas import tpu as pltpu


def _round_up(x, m):
    return ((x + m - 1) // m) * m


def _vmem_capacity_bytes():
    """Per-TensorCore VMEM capacity; conservative fallback = v7x (64 MiB)."""
    try:
        info = pltpu.get_tpu_info()
        cap = getattr(info, "vmem_capacity_bytes", None)
        if cap:
            return int(cap)
    except Exception:
        pass
    return 64 * 1024 * 1024


def _linear_kernel(x_ref, w_ref, b_ref, o_ref):
    # x_ref: (TM, K)   w_ref: (K, TN)   b_ref: (1, TN)   o_ref: (TM, TN)
    acc = jnp.dot(x_ref[...], w_ref[...], preferred_element_type=jnp.float32)
    o_ref[...] = (acc + b_ref[...].astype(jnp.float32)).astype(o_ref.dtype)


def prepare_params(weight, bias, lane_multiple=128, param_dtype=None):
    """One-time parameter prep (outside the per-call path).

    * Transposes the PyTorch (output_dim, input_dim) weight to (K, N): the
      MXU-native RHS layout, lane-dense along N.
    * Pads N up to a multiple of 128 only when output_dim >= 128 (lane-dense
      stores at no meaningful cost); tiny heads stay unpadded so we don't
      write 64x useless output bytes.
    * Optional param_dtype downcast (e.g. jnp.bfloat16) done here, once,
      rather than per call.  Bias stays f32 (f32 accumulation).
    """
    n, k = weight.shape
    w_t = jnp.asarray(weight).T                      # (K, N), one-time
    if param_dtype is not None:
        w_t = w_t.astype(param_dtype)
    bias_f32 = jnp.asarray(bias).astype(jnp.float32)

    n_pad = _round_up(n, lane_multiple) if n >= lane_multiple else n
    if n_pad != n:
        w_t = jnp.zeros((k, n_pad), w_t.dtype).at[:, :n].set(w_t)
        b_p = jnp.zeros((1, n_pad), jnp.float32).at[0, :n].set(bias_f32)
    else:
        b_p = bias_f32.reshape(1, n)
    return w_t, b_p


def single_layer_net_forward(x, w_t, b_p, output_dim):
    """Pallas forward for SingleLayerNet (Linear only, default config).

    Args:
      x:   (batch, input_dim) float32 or bfloat16
      w_t: (input_dim, n_pad) weight from prepare_params ((K, N) layout)
      b_p: (1, n_pad) float32 bias from prepare_params
      output_dim: true (unpadded) output dimension
    Returns:
      (batch, output_dim) float32
    """
    batch, k = x.shape
    k_w, n_pad = w_t.shape
    assert k == k_w, "x / weight inner dims disagree"

    x_itemsize = jnp.dtype(x.dtype).itemsize
    w_itemsize = jnp.dtype(w_t.dtype).itemsize
    sub = 16 if x.dtype == jnp.bfloat16 else 8       # sublane packing

    vmem_cap = _vmem_capacity_bytes()

    # ---- N tiling: keep the (small) weight VMEM-resident whenever possible.
    if n_pad < 128 or k * n_pad * w_itemsize <= (4 << 20):
        tn = n_pad                                   # single j block, resident
    else:
        tn = 128                                     # 128 always divides n_pad
        for cand in (2048, 1024, 512, 256, 128):
            if (cand <= n_pad and n_pad % cand == 0
                    and 2 * k * cand * w_itemsize <= vmem_cap // 3):
                tn = cand
                break

    # ---- Batch tiling: as large as the VMEM budget allows (double-buffered
    # x + w + bias + f32 out), capped at 2048 rows.
    budget = vmem_cap // 2
    fixed = 2 * (k * tn * w_itemsize + tn * 4)
    per_row = 2 * (k * x_itemsize + tn * 4)
    tm_cap = max(sub, ((budget - fixed) // per_row) // sub * sub)
    tm_cap = min(tm_cap, 2048)
    tm = min(tm_cap, _round_up(batch, sub))

    # v7x megacore: make sure there are >= 2 blocks along a "parallel" axis
    # once the batch is big enough; no effect on single-TC v5e/v6e.
    if batch >= 2 * sub and pl.cdiv(batch, tm) * pl.cdiv(n_pad, tn) < 2:
        tm = _round_up(pl.cdiv(batch, 2), sub)

    grid = (pl.cdiv(batch, tm), pl.cdiv(n_pad, tn))
    grid_i, grid_j = grid

    # ---- Scheduler hint: weight counted once when VMEM-resident, else once
    # per batch tile (it is re-fetched for every (i, j) when grid_j > 1).
    cost = pl.CostEstimate(
        flops=2 * batch * k * n_pad,
        transcendentals=0,
        bytes_accessed=(batch * k * x_itemsize
                        + k * n_pad * w_itemsize * (1 if grid_j == 1 else grid_i)
                        + n_pad * 4
                        + batch * n_pad * 4),
    )

    # ---- Scoped VMEM: raise above the 16/32 MiB defaults when the tiles need
    # it, but stay within the chip's physical per-TC capacity (v7x = 64 MiB).
    needed = 2 * (tm * k * x_itemsize + k * tn * w_itemsize
                  + tn * 4 + tm * tn * 4)
    vmem_limit = min(vmem_cap - (4 << 20), max(2 * needed, 32 << 20))
    vmem_limit = int(max(vmem_limit, needed + (1 << 20)))

    out = pl.pallas_call(
        _linear_kernel,
        out_shape=jax.ShapeDtypeStruct((batch, n_pad), jnp.float32),
        grid=grid,
        in_specs=[
            pl.BlockSpec((tm, k), lambda i, j: (i, 0)),   # x tile
            pl.BlockSpec((k, tn), lambda i, j: (0, j)),   # weight tile (K, N)
            pl.BlockSpec((1, tn), lambda i, j: (0, j)),   # bias tile
        ],
        out_specs=pl.BlockSpec((tm, tn), lambda i, j: (i, j)),
        compiler_params=pltpu.CompilerParams(
            dimension_semantics=("parallel", "parallel"),
            vmem_limit_bytes=vmem_limit),
        cost_estimate=cost,
    )(x, w_t, b_p)

    return out if n_pad == output_dim else out[:, :output_dim]


def init_params(key, input_dim, output_dim):
    """Deterministic init mimicking PyTorch nn.Linear default init."""
    kw, kb = jax.random.split(key)
    bound = 1.0 / math.sqrt(input_dim)
    weight = jax.random.uniform(
        kw, (output_dim, input_dim), jnp.float32, minval=-bound, maxval=bound)
    bias = jax.random.uniform(
        kb, (output_dim,), jnp.float32, minval=-bound, maxval=bound)
    return weight, bias


if __name__ == "__main__":
    # Small shapes consistent with the module defaults.
    batch, input_dim, output_dim = 8, 32, 2

    key = jax.random.PRNGKey(0)
    kx, kp = jax.random.split(key)
    x = jax.random.normal(kx, (batch, input_dim), jnp.float32)
    weight, bias = init_params(kp, input_dim, output_dim)

    # One-time parameter prep ((K, N) transpose, lane padding only if N>=128).
    w_t, b_p = prepare_params(weight, bias)
    out = jax.block_until_ready(
        single_layer_net_forward(x, w_t, b_p, output_dim))

    # Reference check against plain JAX (same math as nn.Linear).
    ref = x @ weight.T + bias
    assert out.shape == (batch, output_dim)
    assert jnp.allclose(out, ref, atol=1e-5, rtol=1e-5)

    print("KERNEL_OK")
</pallas_src>

<mosaic_0001>
module attributes {stable_mosaic.version = 11 : i64} {
  func.func @_linear_kernel(%arg0: i32, %arg1: i32, %arg2: memref<8x32xf32, #tpu.memory_space<vmem>>, %arg3: memref<32x2xf32, #tpu.memory_space<vmem>>, %arg4: memref<1x2xf32, #tpu.memory_space<vmem>>, %arg5: memref<8x2xf32, #tpu.memory_space<vmem>>) attributes {dimension_semantics = [#tpu.dimension_semantics<parallel>, #tpu.dimension_semantics<parallel>], iteration_bounds = array<i64: 1, 1>, scalar_prefetch = 0 : i64, scratch_operands = 0 : i64, tpu.core_type = #tpu.core_type<tc>, window_params = [{transform_indices = @transform_0, window_bounds = array<i64: 8, 32>}, {transform_indices = @transform_1, window_bounds = array<i64: 32, 2>}, {transform_indices = @transform_2, window_bounds = array<i64: 1, 2>}, {transform_indices = @transform_3, window_bounds = array<i64: 8, 2>}]} {
    %c0 = arith.constant 0 : index
    %c0_0 = arith.constant 0 : index
    %0 = vector.load %arg2[%c0, %c0_0] : memref<8x32xf32, #tpu.memory_space<vmem>>, vector<8x32xf32>
    %c0_1 = arith.constant 0 : index
    %c0_2 = arith.constant 0 : index
    %1 = vector.load %arg3[%c0_1, %c0_2] : memref<32x2xf32, #tpu.memory_space<vmem>>, vector<32x2xf32>
    %cst = arith.constant dense<0.000000e+00> : vector<8x2xf32>
    %2 = tpu.matmul %0, %1, %cst {dimension_numbers = #tpu.dot_dimension_numbers<[1], [0], [0], [1], [0, 0, 1, 1], [], []>} : vector<8x32xf32>, vector<32x2xf32>, vector<8x2xf32> -> vector<8x2xf32>
    %c0_3 = arith.constant 0 : index
    %c0_4 = arith.constant 0 : index
    %3 = vector.load %arg4[%c0_3, %c0_4] : memref<1x2xf32, #tpu.memory_space<vmem>>, vector<1x2xf32>
    %4 = vector.broadcast %3 : vector<1x2xf32> to vector<8x2xf32>
    %5 = arith.addf %2, %4 : vector<8x2xf32>
    %c0_5 = arith.constant 0 : index
    %c0_6 = arith.constant 0 : index
    %6 = vector.load %arg5[%c0_5, %c0_6] : memref<8x2xf32, #tpu.memory_space<vmem>>, vector<8x2xf32>
    tpu.vector_store %arg5[%c0_5, %c0_6], %5 {strides = array<i32>} : memref<8x2xf32, #tpu.memory_space<vmem>>, vector<8x2xf32>,
    return
  }
  func.func @transform_0(%arg0: i32, %arg1: i32) -> (i32, i32) {
    %c0_i32 = arith.constant 0 : i32
    %c0_i32_0 = arith.constant 0 : i32
    return %arg0, %c0_i32 : i32, i32
  }
  func.func @transform_1(%arg0: i32, %arg1: i32) -> (i32, i32) {
    %c0_i32 = arith.constant 0 : i32
    %c0_i32_0 = arith.constant 0 : i32
    return %c0_i32, %arg1 : i32, i32
  }
  func.func @transform_2(%arg0: i32, %arg1: i32) -> (i32, i32) {
    %c0_i32 = arith.constant 0 : i32
    %c0_i32_0 = arith.constant 0 : i32
    return %c0_i32, %arg1 : i32, i32
  }
  func.func @transform_3(%arg0: i32, %arg1: i32) -> (i32, i32) {
    %c0_i32 = arith.constant 0 : i32
    return %arg0, %arg1 : i32, i32
  }
}

</mosaic_0001>

<llo_original>
// kernel: tpu_custom_call.1
$region0: #{tpu_custom_call.1}
  #allocation0 [shape = 'u32[]', space=smem, size = 0x4, offset = 0x4, fixed_abs, tag = 'smem constant byte address 0x4 - core index']
  #allocation1 [shape = 'u32[144,128]{1,0:T(1,128)}', space=vmem, size = 0x12000, scoped, tag = 'internal scratch']
  %s0 = inlined_call_operand.vmem [shape: f32[8,32], index: 0, kind: input, shape index: {}]
  %s1 = inlined_call_operand.vmem [shape: f32[32,2], index: 1, kind: input, shape index: {}]
  %s2 = inlined_call_operand.vmem [shape: f32[1,2], index: 2, kind: input, shape index: {}]
  %s3 = inlined_call_operand.vmem [shape: f32[8,2], index: 3, kind: output, shape index: {}]
  %s4 = sld [smem:[#allocation0]]
  $region22: #{tpu_custom_call.1} parent=0
    _
  %s6 = ssub.s32 1, %s4
  %s7 = scalar_select 0, %s6, %s4
  // Predicated region
  $region2: #{tpu_custom_call.1} parent=0 // pred_check
    _
  $region3: #{tpu_custom_call.1} parent=0 // pred_check_branch
    %9 = sbr.rel (0) target = $region5
  $region4: #{tpu_custom_call.1} parent=0 // pred_region
    _
  $region5: #{tpu_custom_call.1} parent=0 // pred_fallthru
    _
  // Predicated region
  $region6: #{tpu_custom_call.1} parent=0 // pred_check
    _
  $region7: #{tpu_custom_call.1} parent=0 // pred_check_branch
    %11 = sbr.rel (0) target = $region9
  $region8: #{tpu_custom_call.1} parent=0 // pred_region
    _
  $region9: #{tpu_custom_call.1} parent=0 // pred_fallthru
    _
  // Predicated region
  $region10: #{tpu_custom_call.1} parent=0 // pred_check
    _
  $region11: #{tpu_custom_call.1} parent=0 // pred_check_branch
    %13 = sbr.rel (0) target = $region13
  $region12: #{tpu_custom_call.1} parent=0 // pred_region
    _
  $region13: #{tpu_custom_call.1} parent=0 // pred_fallthru
    _
  %v14 = vld [vmem:[%s0] sm:$0xff]
  %v15 = vld [vmem:[%s1] sm:$0xff]
  %v16 = vld [vmem:[%s1 + $0x8] sm:$0xff]
  %v17 = vld [vmem:[%s1 + $0x10] sm:$0xff]
  %v18 = vld [vmem:[%s1 + $0x18] sm:$0xff]
  %v19 = vld [vmem:[%s2] sm:$0x1]
  %v21 = vlaneseq
  %v22 = vshrl.u32 %v21, 7
  %v23 = vsub.s32 0, %v22
  %v24 = vrot.slane %v19, %v23
  %vm26 = vcmask 261120
  %v28 = vsel %vm26, %v14, 0
  %30 = vmatprep.subr.mxu0 0.0
  %31 = vmatpush1.msra.mxu0 0.0
  %32 = vmatprep.subr.mxu0 0.0
  %33 = vmatpush1.msra.mxu0 0.0
  %34 = vmatprep.subr.mxu0 0.0
  %35 = vmatpush1.msra.mxu0 0.0
  %36 = vmatprep.subr.mxu0 0.0
  %37 = vmatpush1.msra.mxu0 0.0
  %38 = vmatprep.subr.mxu0 0.0
  %39 = vmatpush1.msra.mxu0 0.0
  %40 = vmatprep.subr.mxu0 0.0
  %41 = vmatpush1.msra.mxu0 0.0
  %42 = vmatprep.subr.mxu0 0.0
  %43 = vmatpush1.msra.mxu0 0.0
  %44 = vmatprep.subr.mxu0 0.0
  %45 = vmatpush1.msra.mxu0 0.0
  %46 = vmatprep.subr.mxu0 0.0
  %47 = vmatpush1.msra.mxu0 0.0
  %48 = vmatprep.subr.mxu0 0.0
  %49 = vmatpush1.msra.mxu0 0.0
  %50 = vmatprep.subr.mxu0 0.0
  %51 = vmatpush1.msra.mxu0 0.0
  %52 = vmatprep.subr.mxu0 0.0
  %53 = vmatpush1.msra.mxu0 0.0
  %54 = vmatprep.subr.mxu0 0.0
  %55 = vmatpush1.msra.mxu0 %v18
  %56 = vmatprep.subr.mxu0 0.0
  %57 = vmatpush1.msra.mxu0 %v17
  %58 = vmatprep.subr.mxu0 0.0
  %59 = vmatpush1.msra.mxu0 %v16
  %60 = vmatprep.subr.mxu0 0.0
  %61 = vmatpush1.msra.mxu0 %v15
  %62 = vmatprep.subr.mxu0 0.0
  %63 = vmatpush2.msra.mxu0 0.0
  %64 = vmatprep.subr.mxu0 0.0
  %65 = vmatpush2.msra.mxu0 0.0
  %66 = vmatprep.subr.mxu0 0.0
  %67 = vmatpush2.msra.mxu0 0.0
  %68 = vmatprep.subr.mxu0 0.0
  %69 = vmatpush2.msra.mxu0 0.0
  %70 = vmatprep.subr.mxu0 0.0
  %71 = vmatpush2.msra.mxu0 0.0
  %72 = vmatprep.subr.mxu0 0.0
  %73 = vmatpush2.msra.mxu0 0.0
  %74 = vmatprep.subr.mxu0 0.0
  %75 = vmatpush2.msra.mxu0 0.0
  %76 = vmatprep.subr.mxu0 0.0
  %77 = vmatpush2.msra.mxu0 0.0
  %78 = vmatprep.subr.mxu0 0.0
  %79 = vmatpush2.msra.mxu0 0.0
  %80 = vmatprep.subr.mxu0 0.0
  %81 = vmatpush2.msra.mxu0 0.0
  %82 = vmatprep.subr.mxu0 0.0
  %83 = vmatpush2.msra.mxu0 0.0
  %84 = vmatprep.subr.mxu0 0.0
  %85 = vmatpush2.msra.mxu0 0.0
  %86 = vmatprep.subr.mxu0 0.0
  %87 = vmatpush2.msra.mxu0 0.0
  %88 = vmatprep.subr.mxu0 0.0
  %89 = vmatpush2.msra.mxu0 0.0
  %90 = vmatprep.subr.mxu0 0.0
  %91 = vmatpush2.msra.mxu0 0.0
  %92 = vmatprep.subr.mxu0 0.0
  %93 = vmatpush2.msra.mxu0 0.0
  %94 = vmatprep.mubr.f32.mxu0 0.0
  %95 = vmatmul.mubr.f32.gmra.mxu0 %v28
  %v96 = vpop.f32.mrf.mxu0
  %v97 = vadd.f32 %v24, %v96
  %v98 = vpop.f32.mrf.mxu0
  %99 = vdwg.mxu0
  %vm100 = vcmask 15360
  %101 = vst.msk [vmem:[%s3] sm:$0xff] %vm100, %v97
  // Predicated region
  $region14: #{tpu_custom_call.1} parent=0 // pred_check
    _
  $region15: #{tpu_custom_call.1} parent=0 // pred_check_branch
    %103 = sbr.rel (0) target = $region17
  $region16: #{tpu_custom_call.1} parent=0 // pred_region
    _
  $region17: #{tpu_custom_call.1} parent=0 // pred_fallthru
    _
  // Predicated region
  $region18: #{tpu_custom_call.1} parent=0 // pred_check
    _
  $region19: #{tpu_custom_call.1} parent=0 // pred_check_branch
    %105 = sbr.rel (0) target = $region21
  $region20: #{tpu_custom_call.1} parent=0 // pred_region
    _
  $region21: #{tpu_custom_call.1} parent=0 // pred_fallthru
    _

</llo_original>
